<compile_context>
chip_gen: v7x
topology: tpu7x:2x2x1
jax: 0.10.0
libtpu: 0.0.40
codegen_flags: <defaults>
</compile_context>

<pallas_src>
from functools import partial

import jax
import jax.numpy as jnp
from jax.experimental import pallas as pl
from jax.experimental.pallas import tpu as pltpu

_EPS = 1e-12  # F.normalize default eps


def _prototype_kernel(x_ref, w_ref, rinv_ref, o_ref, acc_ref, *, precision):
    """One (row-tile i, label-tile j, feature-tile k) step.

    x_ref    : (tm, tk)  raw input rows (native dtype), feature slice k
    w_ref    : (tk, tl)  column-normalized prototype slice (native dtype)
    rinv_ref : (tm, 1)   per-row inverse L2 norms (f32), precomputed in wrapper
    o_ref    : (tm, tl)  cosine similarities (written on the last k step)
    acc_ref  : (tm, tl)  f32 accumulator scratch, resident across k
    """
    k = pl.program_id(2)

    @pl.when(k == 0)
    def _():
        acc_ref[...] = jnp.zeros_like(acc_ref)

    acc_ref[...] += jnp.dot(
        x_ref[...], w_ref[...],
        preferred_element_type=jnp.float32, precision=precision,
    )

    @pl.when(k == pl.num_programs(2) - 1)
    def _():
        o_ref[...] = (acc_ref[...] * rinv_ref[...]).astype(o_ref.dtype)


def _round_up(x, m):
    return ((x + m - 1) // m) * m


def _vmem_budgets():
    """Generation-aware (tile_budget_bytes, vmem_limit_cap_bytes)."""
    phys = 64 * 2**20  # conservative default: v7x per-TensorCore VMEM
    try:
        info = pltpu.get_tpu_info()
        cap = getattr(info, "vmem_capacity_bytes", None)
        if cap:
            phys = int(cap)
    except Exception:
        pass
    if phys >= 96 * 2**20:            # v5e / v6e: 128 MiB physical
        return 56 * 2**20, 64 * 2**20
    return 28 * 2**20, 40 * 2**20     # v7x: 64 MiB physical — leave headroom


def _vmem_tile_bytes(tm, tk, tl, xb, wb, ob):
    """Honest VMEM estimate: double-buffered x / w / rinv / out + f32 acc."""
    return (2 * tm * tk * xb          # x tile
            + 2 * tk * tl * wb        # prototype tile
            + 2 * tm * 128 * 4        # row-inv tile (lane-padded to 128)
            + 2 * tm * tl * ob        # output tile
            + tm * tl * 4)            # f32 accumulator scratch


def _choose_tiles(M, D, Lp, xb, wb, ob, budget, sub):
    """Pick (tm, tk, tl).  Prefer: no K tiling, widest label tile, tm >= 256."""
    tm_cap = min(1024, _round_up(M, sub))
    tm_floor = min(256, tm_cap)

    def best_tm(tk, tl):
        tm = tm_cap
        while tm > sub and _vmem_tile_bytes(tm, tk, tl, xb, wb, ob) > budget:
            tm = max(sub, ((tm // 2) // sub) * sub)
        return tm if _vmem_tile_bytes(tm, tk, tl, xb, wb, ob) <= budget else None

    # Label tiles: 128-multiple divisors of Lp, widest first (no gcd collapse).
    tl_cands = [t for t in range(Lp, 0, -128) if Lp % t == 0]
    # Feature tiles: prefer the full feature dim (no K tiling).
    tk_cands = [D] + [t for t in (4096, 2048, 1024, 512, 256, 128) if t < D]

    fallback = None
    for tk in tk_cands:
        for tl in tl_cands:
            tm = best_tm(tk, tl)
            if tm is None:
                continue
            if tm >= tm_floor:
                return tm, tk, tl
            if fallback is None:
                fallback = (tm, tk, tl)
    if fallback is None:            # pathological budget; minimum legal tiling
        return sub, min(D, 128), 128
    return fallback


def prototype_forward(inputs, proto, *, use_bf16=False, precision=None):
    """inputs: (..., D); proto: (D, L). Returns (..., L) cosine similarities."""
    D, L = proto.shape
    lead_shape = inputs.shape[:-1]
    out_dtype = inputs.dtype
    x2d = inputs.reshape(-1, D)
    M = x2d.shape[0]

    # --- Normalization factors: computed ONCE in the wrapper (f32) ----------
    xf = x2d.astype(jnp.float32)
    row_inv = jax.lax.rsqrt(
        jnp.maximum(jnp.sum(xf * xf, axis=-1, keepdims=True), _EPS * _EPS)
    )  # (M, 1) == 1 / max(||x||, eps)

    wf = proto.astype(jnp.float32)
    col_inv = jax.lax.rsqrt(
        jnp.maximum(jnp.sum(wf * wf, axis=0, keepdims=True), _EPS * _EPS)
    )  # (1, L)
    # Fold column norms directly into the prototype (native dtype preserved).
    proto_n = (wf * col_inv).astype(proto.dtype)

    if use_bf16 and x2d.dtype == jnp.float32:
        # Halves HBM traffic / VMEM; MXU already runs f32 at bf16-pass precision.
        x2d = x2d.astype(jnp.bfloat16)
        proto_n = proto_n.astype(jnp.bfloat16)

    xb = jnp.dtype(x2d.dtype).itemsize
    wb = jnp.dtype(proto_n.dtype).itemsize
    ob = jnp.dtype(out_dtype).itemsize
    sub = 8 if xb >= 4 else 16

    # Lane-dense output: pad label dim up to a multiple of 128.
    Lp = _round_up(L, 128)

    tile_budget, vmem_cap = _vmem_budgets()
    tm, tk, tl = _choose_tiles(M, D, Lp, xb, wb, ob, tile_budget, sub)

    # --- Zero padding to tile multiples (zero rows/cols -> zero logits) -----
    Dp = _round_up(D, tk)
    M_pad = _round_up(M, tm)
    if Lp != L or Dp != D:
        proto_n = jnp.pad(proto_n, ((0, Dp - D), (0, Lp - L)))
    if M_pad != M or Dp != D:
        x2d = jnp.pad(x2d, ((0, M_pad - M), (0, Dp - D)))
    if M_pad != M:
        row_inv = jnp.pad(row_inv, ((0, M_pad - M), (0, 0)))

    gi, gj, gk = M_pad // tm, Lp // tl, Dp // tk

    # --- Grid-axis order: re-fetch the cheaper operand ----------------------
    if gk == 1 and gi > 1 and gj > 1:
        traffic_row = M_pad * Dp * xb + gi * Dp * Lp * wb   # x once, proto gi times
        traffic_col = gj * M_pad * Dp * xb + Dp * Lp * wb   # proto once, x gj times
        row_major = traffic_row <= traffic_col
    else:
        row_major = True

    if row_major:
        grid = (gi, gj, gk)
        x_map = lambda i, j, k: (i, k)
        w_map = lambda i, j, k: (k, j)
        r_map = lambda i, j, k: (i, 0)
        o_map = lambda i, j, k: (i, j)
    else:
        grid = (gj, gi, gk)
        x_map = lambda j, i, k: (i, k)
        w_map = lambda j, i, k: (k, j)
        r_map = lambda j, i, k: (i, 0)
        o_map = lambda j, i, k: (i, j)

    # Honest HBM traffic (includes re-fetch factors) for the scheduler.
    if gk == 1:
        if row_major:
            x_reads = M_pad * Dp * xb
            w_reads = Dp * Lp * wb * (gi if gj > 1 else 1)
        else:
            x_reads = M_pad * Dp * xb * (gj if gi > 1 else 1)
            w_reads = Dp * Lp * wb
    else:
        x_reads = M_pad * Dp * xb * gj
        w_reads = Dp * Lp * wb * gi
    bytes_accessed = x_reads + w_reads + M_pad * 4 + M_pad * Lp * ob

    needed = _vmem_tile_bytes(tm, tk, tl, xb, wb, ob)
    vmem_limit = int(min(vmem_cap, max(16 * 2**20, 2 * needed)))

    # NOTE: pl.Buffered(1) on the operand whose block index is constant across
    # the innermost axis would halve its footprint; omitted for lowering-compat
    # safety since the tile search already fits the generation budget.
    out = pl.pallas_call(
        partial(_prototype_kernel, precision=precision),
        out_shape=jax.ShapeDtypeStruct((M_pad, Lp), out_dtype),
        grid_spec=pltpu.PrefetchScalarGridSpec(
            num_scalar_prefetch=0,
            grid=grid,
            in_specs=[
                pl.BlockSpec((tm, tk), x_map),   # input row tile
                pl.BlockSpec((tk, tl), w_map),   # column-normalized proto tile
                pl.BlockSpec((tm, 1), r_map),    # row inverse norms (f32)
            ],
            out_specs=pl.BlockSpec((tm, tl), o_map),
            scratch_shapes=[pltpu.VMEM((tm, tl), jnp.float32)],
        ),
        compiler_params=pltpu.CompilerParams(
            dimension_semantics=("parallel", "parallel", "arbitrary"),
            vmem_limit_bytes=vmem_limit,
        ),
        cost_estimate=pl.CostEstimate(
            flops=2 * M * D * L,
            transcendentals=0,
            bytes_accessed=int(bytes_accessed),
        ),
    )(x2d, proto_n, row_inv)

    return out[:M, :L].reshape(*lead_shape, L)


def init_proto(key, input_dim, num_labels, dtype=jnp.float32):
    """Xavier-uniform init matching torch.nn.init.xavier_uniform_ for a 2-D
    tensor of shape (input_dim, num_labels)."""
    bound = (6.0 / (input_dim + num_labels)) ** 0.5
    return jax.random.uniform(
        key, (input_dim, num_labels), dtype=dtype, minval=-bound, maxval=bound
    )


def _reference_forward(inputs, proto):
    """Plain-JAX reference (normalize-then-matmul, exactly like the module)."""
    eps = 1e-12
    xn = inputs / jnp.maximum(
        jnp.linalg.norm(inputs, axis=-1, keepdims=True), eps
    )
    wn = proto / jnp.maximum(
        jnp.linalg.norm(proto, axis=0, keepdims=True), eps
    )
    return jnp.matmul(xn, wn)


if __name__ == "__main__":
    key = jax.random.PRNGKey(0)
    k_in, k_w = jax.random.split(key)

    batch, seq, input_dim, num_labels = 2, 8, 32, 16

    inputs = jax.random.normal(k_in, (batch, seq, input_dim), dtype=jnp.float32)
    proto = init_proto(k_w, input_dim, num_labels)

    logits = prototype_forward(inputs, proto)
    logits = jax.block_until_ready(logits)

    ref = _reference_forward(inputs, proto)
    assert logits.shape == (batch, seq, num_labels)
    assert bool(jnp.all(jnp.isfinite(logits)))
    # Tolerance covers the TPU MXU's default f32 matmul precision (bf16 passes)
    # plus the post-matmul row-scaling reassociation vs. normalize-then-matmul.
    assert jnp.allclose(logits, ref, atol=1e-2, rtol=1e-2), float(
        jnp.max(jnp.abs(logits - ref))
    )

    print("KERNEL_OK")
</pallas_src>

<mosaic_0001>
module attributes {stable_mosaic.version = 11 : i64} {
  func.func @_prototype_kernel(%arg0: i32, %arg1: i32, %arg2: i32, %arg3: memref<16x32xf32, #tpu.memory_space<vmem>>, %arg4: memref<32x128xf32, #tpu.memory_space<vmem>>, %arg5: memref<16x1xf32, #tpu.memory_space<vmem>>, %arg6: memref<16x128xf32, #tpu.memory_space<vmem>>, %arg7: memref<16x128xf32, #tpu.memory_space<vmem>>) attributes {dimension_semantics = [#tpu.dimension_semantics<parallel>, #tpu.dimension_semantics<parallel>, #tpu.dimension_semantics<arbitrary>], iteration_bounds = array<i64: 1, 1, 1>, scalar_prefetch = 0 : i64, scratch_operands = 1 : i64, tpu.core_type = #tpu.core_type<tc>, window_params = [{transform_indices = @transform_0, window_bounds = array<i64: 16, 32>}, {transform_indices = @transform_1, window_bounds = array<i64: 32, 128>}, {transform_indices = @transform_2, window_bounds = array<i64: 16, 1>}, {transform_indices = @transform_3, window_bounds = array<i64: 16, 128>}]} {
    %c0_i32 = arith.constant 0 : i32
    %0 = arith.cmpi eq, %arg2, %c0_i32 : i32
    %1 = arith.extui %0 : i1 to i32
    %c0_i32_0 = arith.constant 0 : i32
    %2 = arith.cmpi ne, %1, %c0_i32_0 : i32
    scf.if %2 {
      %cst_10 = arith.constant 0.000000e+00 : f32
      %12 = vector.broadcast %cst_10 : f32 to vector<16x128xf32>
      %c0_11 = arith.constant 0 : index
      %c0_12 = arith.constant 0 : index
      %13 = vector.load %arg7[%c0_11, %c0_12] : memref<16x128xf32, #tpu.memory_space<vmem>>, vector<16x128xf32>
      tpu.vector_store %arg7[%c0_11, %c0_12], %12 {strides = array<i32>} : memref<16x128xf32, #tpu.memory_space<vmem>>, vector<16x128xf32>,
    } else {
    }
    %c0 = arith.constant 0 : index
    %c0_1 = arith.constant 0 : index
    %3 = vector.load %arg7[%c0, %c0_1] : memref<16x128xf32, #tpu.memory_space<vmem>>, vector<16x128xf32>
    %c0_2 = arith.constant 0 : index
    %c0_3 = arith.constant 0 : index
    %4 = vector.load %arg3[%c0_2, %c0_3] : memref<16x32xf32, #tpu.memory_space<vmem>>, vector<16x32xf32>
    %c0_4 = arith.constant 0 : index
    %c0_5 = arith.constant 0 : index
    %5 = vector.load %arg4[%c0_4, %c0_5] : memref<32x128xf32, #tpu.memory_space<vmem>>, vector<32x128xf32>
    %cst = arith.constant dense<0.000000e+00> : vector<16x128xf32>
    %6 = tpu.matmul %4, %5, %cst {dimension_numbers = #tpu.dot_dimension_numbers<[1], [0], [0], [1], [0, 0, 1, 1], [], []>} : vector<16x32xf32>, vector<32x128xf32>, vector<16x128xf32> -> vector<16x128xf32>
    %7 = arith.addf %3, %6 : vector<16x128xf32>
    %c0_6 = arith.constant 0 : index
    %c0_7 = arith.constant 0 : index
    %8 = vector.load %arg7[%c0_6, %c0_7] : memref<16x128xf32, #tpu.memory_space<vmem>>, vector<16x128xf32>
    tpu.vector_store %arg7[%c0_6, %c0_7], %7 {strides = array<i32>} : memref<16x128xf32, #tpu.memory_space<vmem>>, vector<16x128xf32>,
    %c0_i32_8 = arith.constant 0 : i32
    %9 = arith.cmpi eq, %arg2, %c0_i32_8 : i32
    %10 = arith.extui %9 : i1 to i32
    %c0_i32_9 = arith.constant 0 : i32
    %11 = arith.cmpi ne, %10, %c0_i32_9 : i32
    scf.if %11 {
      %c0_10 = arith.constant 0 : index
      %c0_11 = arith.constant 0 : index
      %12 = vector.load %arg7[%c0_10, %c0_11] : memref<16x128xf32, #tpu.memory_space<vmem>>, vector<16x128xf32>
      %c0_12 = arith.constant 0 : index
      %c0_13 = arith.constant 0 : index
      %13 = vector.load %arg5[%c0_12, %c0_13] : memref<16x1xf32, #tpu.memory_space<vmem>>, vector<16x1xf32>
      %14 = vector.broadcast %13 : vector<16x1xf32> to vector<16x128xf32>
      %15 = arith.mulf %12, %14 : vector<16x128xf32>
      %c0_14 = arith.constant 0 : index
      %c0_15 = arith.constant 0 : index
      %16 = vector.load %arg6[%c0_14, %c0_15] : memref<16x128xf32, #tpu.memory_space<vmem>>, vector<16x128xf32>
      tpu.vector_store %arg6[%c0_14, %c0_15], %15 {strides = array<i32>} : memref<16x128xf32, #tpu.memory_space<vmem>>, vector<16x128xf32>,
    } else {
    }
    return
  }
  func.func @transform_0(%arg0: i32, %arg1: i32, %arg2: i32) -> (i32, i32) {
    %c0_i32 = arith.constant 0 : i32
    return %arg0, %arg2 : i32, i32
  }
  func.func @transform_1(%arg0: i32, %arg1: i32, %arg2: i32) -> (i32, i32) {
    %c0_i32 = arith.constant 0 : i32
    return %arg2, %arg1 : i32, i32
  }
  func.func @transform_2(%arg0: i32, %arg1: i32, %arg2: i32) -> (i32, i32) {
    %c0_i32 = arith.constant 0 : i32
    %c0_i32_0 = arith.constant 0 : i32
    return %arg0, %c0_i32 : i32, i32
  }
  func.func @transform_3(%arg0: i32, %arg1: i32, %arg2: i32) -> (i32, i32) {
    %c0_i32 = arith.constant 0 : i32
    return %arg0, %arg1 : i32, i32
  }
}

</mosaic_0001>

<llo_original>
// kernel: tpu_custom_call.1
$region0: #{tpu_custom_call.1}
  #allocation0 [shape = 'u32[]', space=smem, size = 0x4, offset = 0x4, fixed_abs, tag = 'smem constant byte address 0x4 - core index']
  #allocation1 [shape = 'u32[144,128]{1,0:T(1,128)}', space=vmem, size = 0x12000, scoped, tag = 'internal scratch']
  #allocation2 [shape = 'f32[16,128]{1,0:T(8,128)}', space=vmem, size = 0x2000, scoped, tag = 'scratch operand']
  %s0 = inlined_call_operand.vmem [shape: f32[16,32], index: 0, kind: input, shape index: {}]
  %s1 = inlined_call_operand.hbm [shape: f32[32,128], index: 1, kind: input, shape index: {}]
  %s2 = inlined_call_operand.vmem [shape: f32[16,1], index: 2, kind: input, shape index: {}]
  %s3 = inlined_call_operand.hbm [shape: f32[16,128], index: 3, kind: output, shape index: {}]
  %s4 = sld [smem:[#allocation0]]
  $region34: #{tpu_custom_call.1} parent=0
    _
  %s6 = ssub.s32 1, %s4
  %s7 = scalar_select 0, %s6, %s4
  $region1: #{tpu_custom_call.1} parent=0
    #allocation3 [shape = 'u8[16384]{0}', space=vmem, size = 0x4000, scoped, tag = 'input window, operand 1, single buffered']
    #allocation4 [shape = 's32[1]{0}', space=sflag, size = 0x4, scoped, tag = 'scoped memory for tpu_custom_call.1']
    #allocation5 [shape = 's32[1]{0}', space=sflag, size = 0x4, scoped, tag = 'scoped memory for tpu_custom_call.1']
    #allocation6 [shape = 'u8[8192]{0}', space=vmem, size = 0x2000, scoped, tag = 'output window, operand 0, single buffered']
    %8 = vsyncpa [#allocation4], 0
    %9 = vsyncpa [#allocation5], 0
    // Predicated region
    $region2: #{tpu_custom_call.1} parent=1 // pred_check
      _
    $region3: #{tpu_custom_call.1} parent=1 // pred_check_branch
      %11 = sbr.rel (0) target = $region5
    $region4: #{tpu_custom_call.1} parent=1 // pred_region
      _
    $region5: #{tpu_custom_call.1} parent=1 // pred_fallthru
      _
    // Predicated region
    $region6: #{tpu_custom_call.1} parent=1 // pred_check
      _
    $region7: #{tpu_custom_call.1} parent=1 // pred_check_branch
      %13 = sbr.rel (0) target = $region9
    $region8: #{tpu_custom_call.1} parent=1 // pred_region
      %s15 = ssub.s32 512, 512
      %16 = vsyncadd [#allocation4], %s15
      %s17 = sshll.u32 [#allocation3], 4
      %s18 = int_to_ptr.vmem [resolvable:$true] %s17
      %23 = dma.hbm_to_vmem [thread:$0]  %s1, 512, %s18, [#allocation4], 128, 128, 8
    $region9: #{tpu_custom_call.1} parent=1 // pred_fallthru
      _
    // Predicated region
    $region10: #{tpu_custom_call.1} parent=1 // pred_check
      _
    $region11: #{tpu_custom_call.1} parent=1 // pred_check_branch
      %25 = sbr.rel (0) target = $region13
    $region12: #{tpu_custom_call.1} parent=1 // pred_region
      _
    $region13: #{tpu_custom_call.1} parent=1 // pred_fallthru
      _
    // Predicated region
    $region14: #{tpu_custom_call.1} parent=1 // pred_check
      _
    $region15: #{tpu_custom_call.1} parent=1 // pred_check_branch
      %27 = sbr.rel (0) target = $region17
    $region16: #{tpu_custom_call.1} parent=1 // pred_region
      %28 = dma.done [#allocation4], 512
    $region17: #{tpu_custom_call.1} parent=1 // pred_fallthru
      _
    %p29 = scmp.eq.s32.totalorder 0, 0
    // Predicated region
    $region18: #{tpu_custom_call.1} parent=1 // pred_check
      %p30 = pneg %p29
    $region19: #{tpu_custom_call.1} parent=1 // pred_check_branch
      %32 = sbr.rel (%p30) target = $region21
    $region20: #{tpu_custom_call.1} parent=1 // pred_region
      %33 = vst [vmem:[#allocation2] sm:$0xff] 0.0
      %34 = vst [vmem:[#allocation2 + $0x8] sm:$0xff] 0.0
    $region21: #{tpu_custom_call.1} parent=1 // pred_fallthru
      _
    %v35 = vld [vmem:[#allocation2] sm:$0xff]
    %v36 = vld [vmem:[#allocation2 + $0x8] sm:$0xff]
    %v37 = vld [vmem:[%s0] sm:$0xff]
    %v38 = vld [vmem:[%s0 + $0x8] sm:$0xff]
    %v39 = vld [vmem:[#allocation3] sm:$0xff]
    %v40 = vld [vmem:[#allocation3 + $0x8] sm:$0xff]
    %v41 = vld [vmem:[#allocation3 + $0x10] sm:$0xff]
    %v42 = vld [vmem:[#allocation3 + $0x18] sm:$0xff]
    %vm43 = vcmask 261120
    %v45 = vsel %vm43, %v37, 0
    %v48 = vsel %vm43, %v38, 0
    %50 = vmatprep.subr.mxu0 0.0
    %51 = vmatpush1.msra.mxu0 %v39
    %52 = vmatprep.subr.mxu0 0.0
    %53 = vmatpush1.msra.mxu0 %v40
    %54 = vmatprep.subr.mxu0 0.0
    %55 = vmatpush1.msra.mxu0 %v41
    %56 = vmatprep.subr.mxu0 0.0
    %57 = vmatpush1.msra.mxu0 %v42
    %58 = vmatprep.subr.mxu0 0.0
    %59 = vmatpush1.msra.mxu0 0.0
    %60 = vmatprep.subr.mxu0 0.0
    %61 = vmatpush1.msra.mxu0 0.0
    %62 = vmatprep.subr.mxu0 0.0
    %63 = vmatpush1.msra.mxu0 0.0
    %64 = vmatprep.subr.mxu0 0.0
    %65 = vmatpush1.msra.mxu0 0.0
    %66 = vmatprep.subr.mxu0 0.0
    %67 = vmatpush1.msra.mxu0 0.0
    %68 = vmatprep.subr.mxu0 0.0
    %69 = vmatpush1.msra.mxu0 0.0
    %70 = vmatprep.subr.mxu0 0.0
    %71 = vmatpush1.msra.mxu0 0.0
    %72 = vmatprep.subr.mxu0 0.0
    %73 = vmatpush1.msra.mxu0 0.0
    %74 = vmatprep.subr.mxu0 0.0
    %75 = vmatpush1.msra.mxu0 0.0
    %76 = vmatprep.subr.mxu0 0.0
    %77 = vmatpush1.msra.mxu0 0.0
    %78 = vmatprep.subr.mxu0 0.0
    %79 = vmatpush1.msra.mxu0 0.0
    %80 = vmatprep.subr.mxu0 0.0
    %81 = vmatpush1.msra.mxu0 0.0
    %82 = vmatprep.subr.mxu0 0.0
    %83 = vmatpush1.msra.mxu0 0.0
    %84 = vmatprep.subr.mxu0 0.0
    %85 = vmatpush1.msra.mxu0 0.0
    %86 = vmatprep.subr.mxu0 0.0
    %87 = vmatpush1.msra.mxu0 0.0
    %88 = vmatprep.subr.mxu0 0.0
    %89 = vmatpush1.msra.mxu0 0.0
    %90 = vmatprep.subr.mxu0 0.0
    %91 = vmatpush1.msra.mxu0 0.0
    %92 = vmatprep.subr.mxu0 0.0
    %93 = vmatpush1.msra.mxu0 0.0
    %94 = vmatprep.subr.mxu0 0.0
    %95 = vmatpush1.msra.mxu0 0.0
    %96 = vmatprep.subr.mxu0 0.0
    %97 = vmatpush1.msra.mxu0 0.0
    %98 = vmatprep.subr.mxu0 0.0
    %99 = vmatpush1.msra.mxu0 0.0
    %100 = vmatprep.subr.mxu0 0.0
    %101 = vmatpush1.msra.mxu0 0.0
    %102 = vmatprep.subr.mxu0 0.0
    %103 = vmatpush1.msra.mxu0 0.0
    %104 = vmatprep.subr.mxu0 0.0
    %105 = vmatpush1.msra.mxu0 0.0
    %106 = vmatprep.subr.mxu0 0.0
    %107 = vmatpush1.msra.mxu0 0.0
    %108 = vmatprep.subr.mxu0 0.0
    %109 = vmatpush1.msra.mxu0 0.0
    %110 = vmatprep.subr.mxu0 0.0
    %111 = vmatpush1.msra.mxu0 0.0
    %112 = vmatprep.subr.mxu0 0.0
    %113 = vmatpush1.msra.mxu0 0.0
    %114 = vmatprep.mubr.f32.mxu0 0.0
    %115 = vmatmul.mubr.f32.gmra.mrb[0].mxu0 %v45
    %v116 = vpop.f32.mrb[0].mxu0
    %v117 = vadd.f32 0.0, %v116
    %v118 = vpop.f32.mrb[0].mxu0
    %119 = vmatprep.mubr.f32.mxu0 0.0
    %120 = vmatmul.mubr.f32.gmra.mrb[0].mxu0 %v48
    %v121 = vpop.f32.mrb[0].mxu0
    %v122 = vadd.f32 0.0, %v121
    %v123 = vpop.f32.mrb[0].mxu0
    %124 = vdwg.mxu0
    %v125 = vadd.f32 %v35, %v117
    %v126 = vadd.f32 %v36, %v122
    %127 = vst [vmem:[#allocation2] sm:$0xff] %v125
    %128 = vst [vmem:[#allocation2 + $0x8] sm:$0xff] %v126
    // Predicated region
    $region22: #{tpu_custom_call.1} parent=1 // pred_check
      %p129 = pneg %p29
    $region23: #{tpu_custom_call.1} parent=1 // pred_check_branch
      %131 = sbr.rel (%p129) target = $region25
    $region24: #{tpu_custom_call.1} parent=1 // pred_region
      %v132 = vld [vmem:[#allocation2] sm:$0xff]
      %v133 = vld [vmem:[#allocation2 + $0x8] sm:$0xff]
      %v134 = vld [vmem:[%s2] sm:$0xff]
      %v135 = vld [vmem:[%s2 + $0x8] sm:$0xff]
      %137 = vset.pattern.permute.xlu0 0
      %138 = vperm.xlu0 %137, %v134
      %v139 = vpop.permute.xlu0 %138
      %142 = vset.pattern.permute.xlu0 0
      %143 = vperm.xlu0 %142, %v135
      %v144 = vpop.permute.xlu0 %143
      %v146 = vmul.f32 %v132, %v139
      %v147 = vmul.f32 %v133, %v144
      %148 = vst [vmem:[#allocation6] sm:$0xff] %v146
      %149 = vst [vmem:[#allocation6 + $0x8] sm:$0xff] %v147
    $region25: #{tpu_custom_call.1} parent=1 // pred_fallthru
      _
    // Predicated region
    $region26: #{tpu_custom_call.1} parent=1 // pred_check
      _
    $region27: #{tpu_custom_call.1} parent=1 // pred_check_branch
      %151 = sbr.rel (0) target = $region29
    $region28: #{tpu_custom_call.1} parent=1 // pred_region
      %s153 = ssub.s32 256, 256
      %154 = vsyncadd [#allocation5], %s153
      %s155 = sshll.u32 [#allocation6], 4
      %s156 = int_to_ptr.vmem [resolvable:$true] %s155
      %161 = dma.vmem_to_hbm [thread:$0]  %s156, 256, %s3, [#allocation5], 128, 128, 8
    $region29: #{tpu_custom_call.1} parent=1 // pred_fallthru
      _
    // Predicated region
    $region30: #{tpu_custom_call.1} parent=1 // pred_check
      _
    $region31: #{tpu_custom_call.1} parent=1 // pred_check_branch
      %163 = sbr.rel (0) target = $region33
    $region32: #{tpu_custom_call.1} parent=1 // pred_region
      %164 = dma.done [#allocation5], 256
    $region33: #{tpu_custom_call.1} parent=1 // pred_fallthru
      _
    %165 = vsyncpa [#allocation4], 1
    %166 = vsyncpa [#allocation5], 1

</llo_original>
